<compile_context>
chip_gen: v5e
topology: v5e:2x2
jax: 0.10.0
libtpu: 0.0.40
codegen_flags: <defaults>
</compile_context>

<pallas_src>
import functools

import jax
import jax.numpy as jnp
from jax import lax
from jax.experimental import pallas as pl
from jax.experimental.pallas import tpu as pltpu


def mlp_kernel(x_ref, w1_ref, b1_ref, w2_ref, b2_ref, o_ref, *,
               batch, block_b, mask_rows):
    x = x_ref[...]

    # Ragged last block: zero invalid rows so exp/log stay finite. Row-local
    # math + Pallas-masked stores mean this only guards against NaN/Inf noise.
    if mask_rows:
        rows_left = batch - pl.program_id(0) * block_b
        row = lax.broadcasted_iota(jnp.int32, (x.shape[0], 1), 0)
        x = jnp.where(row < rows_left, x, jnp.zeros_like(x))

    # fc1 (MXU) + bias; sigmoid via tanh identity (EUP slot, no VALU divide).
    h = jnp.dot(x, w1_ref[...], preferred_element_type=jnp.float32) + b1_ref[...]
    h = 0.5 * jnp.tanh(0.5 * h) + 0.5

    # fc2 (MXU) + bias — output kept at true D_out width (no lane padding).
    logits = jnp.dot(h, w2_ref[...], preferred_element_type=jnp.float32) + b2_ref[...]

    # Numerically-stable log_softmax over the last dim.
    m = jnp.max(logits, axis=1, keepdims=True)
    shifted = logits - m
    lse = jnp.log(jnp.sum(jnp.exp(shifted), axis=1, keepdims=True))
    o_ref[...] = (shifted - lse).astype(o_ref.dtype)


def _round_up(n, m):
    return ((n + m - 1) // m) * m


def pad_params(w1, b1, w2, b2):
    """Pad hidden dim to a multiple of 128 ONCE (outside the hot forward path).

    w1:(D_in,H), b1:(1,H), w2:(H,D_out), b2:(1,D_out).
    Zero padding is numerically exact (padded w2 rows are zero).
    """
    d_hidden = w1.shape[1]
    h_pad = _round_up(d_hidden, 128)
    w1p = jnp.pad(w1, ((0, 0), (0, h_pad - d_hidden)))
    b1p = jnp.pad(b1, ((0, 0), (0, h_pad - d_hidden)))
    w2p = jnp.pad(w2, ((0, h_pad - d_hidden), (0, 0)))
    return w1p, b1p, w2p, b2


def net_forward(x, w1p, b1p, w2p, b2, *, block_b=1024):
    """x:(B,D_in); padded params from pad_params. Returns (B, D_out) log-probs."""
    B, d_in = x.shape
    h_pad = w1p.shape[1]
    d_out = w2p.shape[1]

    # Batch tile: >= 8 sublanes; ~half the batch (rounded to 8) so the parallel
    # grid has >= 2 steps (both v7x TensorCores busy); capped at block_b so huge
    # batches still pipeline with ample grid steps.
    half = _round_up(max(1, -(-B // 2)), 8)
    tb = max(8, min(block_b, half))
    grid = (pl.cdiv(B, tb),)
    mask_rows = (B % tb) != 0

    kernel = functools.partial(
        mlp_kernel, batch=B, block_b=tb, mask_rows=mask_rows)

    # Advisory cost hint so XLA schedules this small, latency-bound call tightly.
    flops = 2 * B * (d_in * h_pad + h_pad * d_out)
    transcendentals = B * (h_pad + d_out)  # tanh + exp
    bytes_accessed = 4 * (
        B * d_in + d_in * h_pad + h_pad + h_pad * d_out + d_out + B * d_out
    )

    return pl.pallas_call(
        kernel,
        out_shape=jax.ShapeDtypeStruct((B, d_out), x.dtype),
        grid=grid,
        in_specs=[
            pl.BlockSpec((tb, d_in), lambda i: (i, 0)),      # x: tiled over batch
            pl.BlockSpec((d_in, h_pad), lambda i: (0, 0)),   # w1: VMEM-resident
            pl.BlockSpec((1, h_pad), lambda i: (0, 0)),      # b1: VMEM-resident
            pl.BlockSpec((h_pad, d_out), lambda i: (0, 0)),  # w2: VMEM-resident
            pl.BlockSpec((1, d_out), lambda i: (0, 0)),      # b2: VMEM-resident
        ],
        out_specs=pl.BlockSpec((tb, d_out), lambda i: (i, 0)),
        compiler_params=pltpu.CompilerParams(
            dimension_semantics=("parallel",),
        ),
        cost_estimate=pl.CostEstimate(
            flops=flops,
            transcendentals=transcendentals,
            bytes_accessed=bytes_accessed,
        ),
    )(x, w1p, b1p, w2p, b2)


def init_params(key, input_size, hidden, output_size):
    k1, k2, k3, k4 = jax.random.split(key, 4)
    # Deterministic init (uniform, PyTorch-Linear-like bounds).
    bound1 = 1.0 / jnp.sqrt(input_size)
    bound2 = 1.0 / jnp.sqrt(hidden)
    w1 = jax.random.uniform(k1, (input_size, hidden), jnp.float32, -bound1, bound1)
    b1 = jax.random.uniform(k2, (1, hidden), jnp.float32, -bound1, bound1)
    w2 = jax.random.uniform(k3, (hidden, output_size), jnp.float32, -bound2, bound2)
    b2 = jax.random.uniform(k4, (1, output_size), jnp.float32, -bound2, bound2)
    return w1, b1, w2, b2


if __name__ == "__main__":
    key = jax.random.PRNGKey(0)
    kx, kp = jax.random.split(key)

    B, input_size, hidden, output_size = 8, 32, 100, 16
    x = jax.random.normal(kx, (B, input_size), jnp.float32)
    w1, b1, w2, b2 = init_params(kp, input_size, hidden, output_size)

    # Pad weights once, outside the hot path.
    w1p, b1p, w2p, b2p = pad_params(w1, b1, w2, b2)

    out = net_forward(x, w1p, b1p, w2p, b2p)
    out = jax.block_until_ready(out)

    # Sanity check vs. pure-JAX reference (same math as the PyTorch module).
    h_ref = jax.nn.sigmoid(x @ w1 + b1)
    logits_ref = h_ref @ w2 + b2
    ref = jax.nn.log_softmax(logits_ref, axis=1)
    assert out.shape == (B, output_size)
    assert jnp.allclose(out, ref, atol=1e-5, rtol=1e-5)

    # Also exercise a non-multiple batch to cover the ragged last block path.
    B2 = 13
    x2 = jax.random.normal(kx, (B2, input_size), jnp.float32)
    out2 = jax.block_until_ready(net_forward(x2, w1p, b1p, w2p, b2p, block_b=8))
    ref2 = jax.nn.log_softmax(jax.nn.sigmoid(x2 @ w1 + b1) @ w2 + b2, axis=1)
    assert out2.shape == (B2, output_size)
    assert jnp.allclose(out2, ref2, atol=1e-5, rtol=1e-5)
    assert bool(jnp.all(jnp.isfinite(out2)))

    print("KERNEL_OK")
</pallas_src>

<mosaic_0001>
module attributes {stable_mosaic.version = 11 : i64} {
  func.func @mlp_kernel(%arg0: i32, %arg1: memref<8x32xf32, #tpu.memory_space<vmem>>, %arg2: memref<32x128xf32, #tpu.memory_space<vmem>>, %arg3: memref<1x128xf32, #tpu.memory_space<vmem>>, %arg4: memref<128x16xf32, #tpu.memory_space<vmem>>, %arg5: memref<1x16xf32, #tpu.memory_space<vmem>>, %arg6: memref<8x16xf32, #tpu.memory_space<vmem>>) attributes {dimension_semantics = [#tpu.dimension_semantics<parallel>], iteration_bounds = array<i64: 1>, scalar_prefetch = 0 : i64, scratch_operands = 0 : i64, tpu.core_type = #tpu.core_type<tc>, window_params = [{transform_indices = @transform_0, window_bounds = array<i64: 8, 32>}, {pipeline_mode = #tpu.pipeline_mode<synchronous>, transform_indices = @transform_1, window_bounds = array<i64: 32, 128>}, {pipeline_mode = #tpu.pipeline_mode<synchronous>, transform_indices = @transform_2, window_bounds = array<i64: 1, 128>}, {pipeline_mode = #tpu.pipeline_mode<synchronous>, transform_indices = @transform_3, window_bounds = array<i64: 128, 16>}, {pipeline_mode = #tpu.pipeline_mode<synchronous>, transform_indices = @transform_4, window_bounds = array<i64: 1, 16>}, {transform_indices = @transform_5, window_bounds = array<i64: 8, 16>}]} {
    %c0 = arith.constant 0 : index
    %c0_0 = arith.constant 0 : index
    %0 = vector.load %arg1[%c0, %c0_0] : memref<8x32xf32, #tpu.memory_space<vmem>>, vector<8x32xf32>
    %c0_1 = arith.constant 0 : index
    %c0_2 = arith.constant 0 : index
    %1 = vector.load %arg2[%c0_1, %c0_2] : memref<32x128xf32, #tpu.memory_space<vmem>>, vector<32x128xf32>
    %cst = arith.constant dense<0.000000e+00> : vector<8x128xf32>
    %2 = tpu.matmul %0, %1, %cst {dimension_numbers = #tpu.dot_dimension_numbers<[1], [0], [0], [1], [0, 0, 1, 1], [], []>} : vector<8x32xf32>, vector<32x128xf32>, vector<8x128xf32> -> vector<8x128xf32>
    %c0_3 = arith.constant 0 : index
    %c0_4 = arith.constant 0 : index
    %3 = vector.load %arg3[%c0_3, %c0_4] : memref<1x128xf32, #tpu.memory_space<vmem>>, vector<1x128xf32>
    %4 = vector.broadcast %3 : vector<1x128xf32> to vector<8x128xf32>
    %5 = arith.addf %2, %4 : vector<8x128xf32>
    %cst_5 = arith.constant 5.000000e-01 : f32
    %6 = vector.broadcast %cst_5 : f32 to vector<8x128xf32>
    %7 = arith.mulf %6, %5 : vector<8x128xf32>
    %8 = math.tanh %7 : vector<8x128xf32>
    %cst_6 = arith.constant 5.000000e-01 : f32
    %9 = vector.broadcast %cst_6 : f32 to vector<8x128xf32>
    %10 = arith.mulf %9, %8 : vector<8x128xf32>
    %cst_7 = arith.constant 5.000000e-01 : f32
    %11 = vector.broadcast %cst_7 : f32 to vector<8x128xf32>
    %12 = arith.addf %10, %11 : vector<8x128xf32>
    %c0_8 = arith.constant 0 : index
    %c0_9 = arith.constant 0 : index
    %13 = vector.load %arg4[%c0_8, %c0_9] : memref<128x16xf32, #tpu.memory_space<vmem>>, vector<128x16xf32>
    %cst_10 = arith.constant dense<0.000000e+00> : vector<8x16xf32>
    %14 = tpu.matmul %12, %13, %cst_10 {dimension_numbers = #tpu.dot_dimension_numbers<[1], [0], [0], [1], [0, 0, 1, 1], [], []>} : vector<8x128xf32>, vector<128x16xf32>, vector<8x16xf32> -> vector<8x16xf32>
    %c0_11 = arith.constant 0 : index
    %c0_12 = arith.constant 0 : index
    %15 = vector.load %arg5[%c0_11, %c0_12] : memref<1x16xf32, #tpu.memory_space<vmem>>, vector<1x16xf32>
    %16 = vector.broadcast %15 : vector<1x16xf32> to vector<8x16xf32>
    %17 = arith.addf %14, %16 : vector<8x16xf32>
    %cst_13 = arith.constant dense<0xFF800000> : vector<8xf32>
    %18 = vector.multi_reduction <maximumf>, %17, %cst_13 [1] : vector<8x16xf32> to vector<8xf32>
    %19 = vector.shape_cast %18 : vector<8xf32> to vector<8x1xf32>
    %20 = vector.broadcast %19 : vector<8x1xf32> to vector<8x16xf32>
    %21 = arith.subf %17, %20 : vector<8x16xf32>
    %22 = math.exp %21 : vector<8x16xf32>
    %cst_14 = arith.constant dense<0.000000e+00> : vector<8xf32>
    %23 = vector.multi_reduction <add>, %22, %cst_14 [1] : vector<8x16xf32> to vector<8xf32>
    %24 = vector.shape_cast %23 : vector<8xf32> to vector<8x1xf32>
    %25 = math.log %24 : vector<8x1xf32>
    %26 = vector.broadcast %25 : vector<8x1xf32> to vector<8x16xf32>
    %27 = arith.subf %21, %26 : vector<8x16xf32>
    %c0_15 = arith.constant 0 : index
    %c0_16 = arith.constant 0 : index
    %28 = vector.load %arg6[%c0_15, %c0_16] : memref<8x16xf32, #tpu.memory_space<vmem>>, vector<8x16xf32>
    tpu.vector_store %arg6[%c0_15, %c0_16], %27 {strides = array<i32>} : memref<8x16xf32, #tpu.memory_space<vmem>>, vector<8x16xf32>,
    return
  }
  func.func @transform_0(%arg0: i32) -> (i32, i32) {
    %c0_i32 = arith.constant 0 : i32
    %c0_i32_0 = arith.constant 0 : i32
    return %arg0, %c0_i32 : i32, i32
  }
  func.func @transform_1(%arg0: i32) -> (i32, i32) {
    %c0_i32 = arith.constant 0 : i32
    %c0_i32_0 = arith.constant 0 : i32
    %c0_i32_1 = arith.constant 0 : i32
    return %c0_i32, %c0_i32_0 : i32, i32
  }
  func.func @transform_2(%arg0: i32) -> (i32, i32) {
    %c0_i32 = arith.constant 0 : i32
    %c0_i32_0 = arith.constant 0 : i32
    %c0_i32_1 = arith.constant 0 : i32
    return %c0_i32, %c0_i32_0 : i32, i32
  }
  func.func @transform_3(%arg0: i32) -> (i32, i32) {
    %c0_i32 = arith.constant 0 : i32
    %c0_i32_0 = arith.constant 0 : i32
    %c0_i32_1 = arith.constant 0 : i32
    return %c0_i32, %c0_i32_0 : i32, i32
  }
  func.func @transform_4(%arg0: i32) -> (i32, i32) {
    %c0_i32 = arith.constant 0 : i32
    %c0_i32_0 = arith.constant 0 : i32
    %c0_i32_1 = arith.constant 0 : i32
    return %c0_i32, %c0_i32_0 : i32, i32
  }
  func.func @transform_5(%arg0: i32) -> (i32, i32) {
    %c0_i32 = arith.constant 0 : i32
    %c0_i32_0 = arith.constant 0 : i32
    return %arg0, %c0_i32 : i32, i32
  }
}

</mosaic_0001>

<llo_original>
// kernel: tpu_custom_call.1
$region0: #{tpu_custom_call.1}
  #allocation0 [shape = 'u32[]', space=smem, size = 0x4, offset = 0x4, fixed_abs, tag = 'smem constant byte address 0x4 - core index']
  #allocation1 [shape = 'u32[72,128]{1,0:T(1,128)}', space=vmem, size = 0x9000, scoped, tag = 'internal scratch']
  %s0 = inlined_call_operand.vmem [shape: f32[8,32], index: 0, kind: input, shape index: {}]
  %s1 = inlined_call_operand.vmem [shape: f32[32,128], index: 1, kind: input, shape index: {}]
  %s2 = inlined_call_operand.vmem [shape: f32[1,128], index: 2, kind: input, shape index: {}]
  %s3 = inlined_call_operand.vmem [shape: f32[128,16], index: 3, kind: input, shape index: {}]
  %s4 = inlined_call_operand.vmem [shape: f32[1,16], index: 4, kind: input, shape index: {}]
  %s5 = inlined_call_operand.hbm [shape: f32[8,16], index: 5, kind: output, shape index: {}]
  %s6 = sld [smem:[#allocation0]]
  $region30: #{tpu_custom_call.1} parent=0
    _
  %s8 = ssub.s32 1, %s6
  %s9 = scalar_select 0, %s8, %s6
  $region1: #{tpu_custom_call.1} parent=0
    #allocation2 [shape = 'u8[4096]{0}', space=vmem, size = 0x1000, scoped, tag = 'output window, operand 0, single buffered']
    #allocation3 [shape = 's32[1]{0}', space=sflag, size = 0x4, scoped, tag = 'scoped memory for tpu_custom_call.1']
    %10 = vsyncpa [#allocation3], 0
    // Predicated region
    $region2: #{tpu_custom_call.1} parent=1 // pred_check
      _
    $region3: #{tpu_custom_call.1} parent=1 // pred_check_branch
      %12 = sbr.rel (0) target = $region5
    $region4: #{tpu_custom_call.1} parent=1 // pred_region
      _
    $region5: #{tpu_custom_call.1} parent=1 // pred_fallthru
      _
    // Predicated region
    $region6: #{tpu_custom_call.1} parent=1 // pred_check
      _
    $region7: #{tpu_custom_call.1} parent=1 // pred_check_branch
      %14 = sbr.rel (0) target = $region9
    $region8: #{tpu_custom_call.1} parent=1 // pred_region
      _
    $region9: #{tpu_custom_call.1} parent=1 // pred_fallthru
      _
    // Predicated region
    $region10: #{tpu_custom_call.1} parent=1 // pred_check
      _
    $region11: #{tpu_custom_call.1} parent=1 // pred_check_branch
      %16 = sbr.rel (0) target = $region13
    $region12: #{tpu_custom_call.1} parent=1 // pred_region
      _
    $region13: #{tpu_custom_call.1} parent=1 // pred_fallthru
      _
    // Predicated region
    $region14: #{tpu_custom_call.1} parent=1 // pred_check
      _
    $region15: #{tpu_custom_call.1} parent=1 // pred_check_branch
      %18 = sbr.rel (0) target = $region17
    $region16: #{tpu_custom_call.1} parent=1 // pred_region
      _
    $region17: #{tpu_custom_call.1} parent=1 // pred_fallthru
      _
    // Predicated region
    $region18: #{tpu_custom_call.1} parent=1 // pred_check
      _
    $region19: #{tpu_custom_call.1} parent=1 // pred_check_branch
      %20 = sbr.rel (0) target = $region21
    $region20: #{tpu_custom_call.1} parent=1 // pred_region
      _
    $region21: #{tpu_custom_call.1} parent=1 // pred_fallthru
      _
    %v21 = vld [vmem:[%s0] sm:$0xff]
    %v22 = vld [vmem:[%s1] sm:$0xff]
    %v23 = vld [vmem:[%s1 + $0x8] sm:$0xff]
    %v24 = vld [vmem:[%s1 + $0x10] sm:$0xff]
    %v25 = vld [vmem:[%s1 + $0x18] sm:$0xff]
    %v26 = vld [vmem:[%s2] sm:$0x1]
    %v28 = vperm.slane %v26, 0
    %vm30 = vcmask 261120
    %v32 = vsel %vm30, %v21, 0
    %34 = vmatpush.msra.mxu0 0.0
    %35 = vmatpush.msra.mxu0 0.0
    %36 = vmatpush.msra.mxu0 0.0
    %37 = vmatpush.msra.mxu0 0.0
    %38 = vmatpush.msra.mxu0 0.0
    %39 = vmatpush.msra.mxu0 0.0
    %40 = vmatpush.msra.mxu0 0.0
    %41 = vmatpush.msra.mxu0 0.0
    %42 = vmatpush.msra.mxu0 0.0
    %43 = vmatpush.msra.mxu0 0.0
    %44 = vmatpush.msra.mxu0 0.0
    %45 = vmatpush.msra.mxu0 0.0
    %46 = vmatpush.msra.mxu0 %v25
    %47 = vmatpush.msra.mxu0 %v24
    %48 = vmatpush.msra.mxu0 %v23
    %49 = vmatpush.msra.mxu0 %v22
    %50 = vmatmul.f32.gmra.mxu0 %v32
    %v51 = vpop.f32.mrf.mxu0
    %v52 = vadd.f32 %v28, %v51
    %53 = vdwg.mxu0
    %v54 = vmul.f32 %v52, 0.5
    %v55 = vtanh.pop %v54
    %v56 = vmul.f32 %v55, 0.5
    %v57 = vadd.f32 %v56, 0.5
    %v58 = vld [vmem:[%s3] sm:$0xff]
    %v59 = vld [vmem:[%s3 + $0x8] sm:$0xff]
    %v60 = vld [vmem:[%s3 + $0x10] sm:$0xff]
    %v61 = vld [vmem:[%s3 + $0x18] sm:$0xff]
    %v62 = vld [vmem:[%s3 + $0x20] sm:$0xff]
    %v63 = vld [vmem:[%s3 + $0x28] sm:$0xff]
    %v64 = vld [vmem:[%s3 + $0x30] sm:$0xff]
    %v65 = vld [vmem:[%s3 + $0x38] sm:$0xff]
    %v66 = vld [vmem:[%s3 + $0x40] sm:$0xff]
    %v67 = vld [vmem:[%s3 + $0x48] sm:$0xff]
    %v68 = vld [vmem:[%s3 + $0x50] sm:$0xff]
    %v69 = vld [vmem:[%s3 + $0x58] sm:$0xff]
    %v70 = vld [vmem:[%s3 + $0x60] sm:$0xff]
    %v71 = vld [vmem:[%s3 + $0x68] sm:$0xff]
    %v72 = vld [vmem:[%s3 + $0x70] sm:$0xff]
    %v73 = vld [vmem:[%s3 + $0x78] sm:$0xff]
    %v74 = vld [vmem:[%s4] sm:$0x1]
    %v76 = vperm.slane %v74, 0
    %78 = vmatpush.msra.mxu0 %v73
    %79 = vmatpush.msra.mxu0 %v72
    %80 = vmatpush.msra.mxu0 %v71
    %81 = vmatpush.msra.mxu0 %v70
    %82 = vmatpush.msra.mxu0 %v69
    %83 = vmatpush.msra.mxu0 %v68
    %84 = vmatpush.msra.mxu0 %v67
    %85 = vmatpush.msra.mxu0 %v66
    %86 = vmatpush.msra.mxu0 %v65
    %87 = vmatpush.msra.mxu0 %v64
    %88 = vmatpush.msra.mxu0 %v63
    %89 = vmatpush.msra.mxu0 %v62
    %90 = vmatpush.msra.mxu0 %v61
    %91 = vmatpush.msra.mxu0 %v60
    %92 = vmatpush.msra.mxu0 %v59
    %93 = vmatpush.msra.mxu0 %v58
    %94 = vmatmul.f32.gmra.mxu0 %v57
    %v95 = vpop.f32.mrf.mxu0
    %v96 = vadd.f32 %v76, %v95
    %97 = vdwg.mxu0
    %vm98 = vcmask 130048
    %v99 = vsel %vm98, %v96, -inf
    %100 = vmax.xlane.f32.xlu0 %v99
    %v101 = vpop.xlane.xlu0 %100
    %v102 = vsub.f32 %v96, %v101
    %v103 = vmul.f32 %v102, 1.442695
    %v104 = vpow.pop %v103
    %v105 = vsel %vm98, %v104, 0.0
    %106 = vadd.xlane.f32.xlu0 %v105
    %v107 = vpop.xlane.xlu0 %106
    %v108 = vlog2.pop %v107
    %v109 = vmul.f32 %v108, 0.6931472
    %v110 = vsub.f32 %v102, %v109
    %111 = vst.msk [vmem:[#allocation2] sm:$0xff] %vm98, %v110
    // Predicated region
    $region22: #{tpu_custom_call.1} parent=1 // pred_check
      _
    $region23: #{tpu_custom_call.1} parent=1 // pred_check_branch
      %113 = sbr.rel (0) target = $region25
    $region24: #{tpu_custom_call.1} parent=1 // pred_region
      %115 = vsyncadd [#allocation3], 0
      %s117 = sshll.u32 [#allocation2], 4
      %s118 = int_to_ptr.vmem [resolvable:$true] %s117
      %s119 = sshll.u32 %s5, 4
      %s120 = int_to_ptr.hbm [resolvable:$true] %s119
      %122 = dma.vmem_to_hbm [thread:$0]  %s118, 128, %s120, [#allocation3]
    $region25: #{tpu_custom_call.1} parent=1 // pred_fallthru
      _
    // Predicated region
    $region26: #{tpu_custom_call.1} parent=1 // pred_check
      _
    $region27: #{tpu_custom_call.1} parent=1 // pred_check_branch
      %124 = sbr.rel (0) target = $region29
    $region28: #{tpu_custom_call.1} parent=1 // pred_region
      %126 = dma.done [#allocation3], 128
    $region29: #{tpu_custom_call.1} parent=1 // pred_fallthru
      _
    %127 = vsyncpa [#allocation3], 1

</llo_original>
